<compile_context>
chip_gen: v6e
topology: v6e:2x2x1
jax: 0.10.0
libtpu: 0.0.40
codegen_flags: <defaults>
</compile_context>

<pallas_src>
import functools
import math

import jax
import jax.numpy as jnp
from jax import lax
from jax.experimental import pallas as pl
from jax.experimental.pallas import tpu as pltpu

_LANES = 128   # TPU lane width
_CS = 8        # sublane rows per register-resident compute chunk


def _dynamic_cnf_kernel(par_ref, x_ref, prev_ref, out_ref, *, k, dim):
    """One particle tile.

    par_ref (SMEM, f32[P]): packed [w(k*D), u(k*D), b(k), w.u(k), A(D*D),
                                    1/(sigma*sqrt2)(D), logZ(1)]
    x_ref, prev_ref (VMEM, f32[tr, 128]): native layout, lane l of row rr is
        dim (l % D) of particle rr*(128/D) + l//D.
    out_ref (VMEM, f32[tr, 128/D]): dyn_log_prob, particle order.
    """
    D = dim
    ppr = _LANES // D                      # particles per 128-lane row
    rows = x_ref.shape[0]

    # ---- static offsets into the packed SMEM parameter vector --------------
    OW = 0
    OU = OW + k * D
    OB = OU + k * D
    OWU = OB + k
    OA = OWU + k
    OISIG = OA + D * D
    OLOGZ = OISIG + D

    # ---- loop-invariant lane-pattern constants (hoisted, ~1 vreg each) -----
    lane = lax.broadcasted_iota(jnp.int32, (_CS, _LANES), 1)
    dlane = lane & (D - 1)                 # latent-dim index of each lane

    def lane_const(val_of_dim):
        c = jnp.full((_CS, _LANES), val_of_dim(0), jnp.float32)
        for d in range(1, D):
            c = jnp.where(dlane == d, val_of_dim(d), c)
        return c

    cisig = lane_const(lambda d: par_ref[OISIG + d])
    cA = [lane_const(lambda d, s=s: par_ref[OA + d * D + ((d + s) % D)])
          for s in range(D)]
    cw = [lane_const(lambda d, i=i: par_ref[OW + i * D + d]) for i in range(k)]
    cu = [lane_const(lambda d, i=i: par_ref[OU + i * D + d]) for i in range(k)]
    b_i = [par_ref[OB + i] for i in range(k)]
    wu_i = [par_ref[OWU + i] for i in range(k)]
    logz = par_ref[OLOGZ]

    rot_sel = [dlane < (D - s) for s in range(1, D)]

    def rotg(y, s):
        """Rotate y by s within every group of D adjacent lanes (no wraparound
        between groups).  Gives each lane the value of dim (d+s) mod D."""
        left = pltpu.roll(y, _LANES - s, 1)     # y[l + s]       (d + s <  D)
        right = pltpu.roll(y, D - s, 1)         # y[l - (D - s)] (d + s >= D)
        return jnp.where(rot_sel[s - 1], left, right)

    def groupsum(y):
        tot = y
        for s in range(1, D):
            tot = tot + rotg(y, s)
        return tot                              # group-replicated per-particle sum

    # butterfly lane-compaction masks: group-replicated -> first 128/D lanes dense
    comp = []
    S = D
    while S < _LANES:
        sh = S - S // D
        m = lane & (2 * S - 1)
        comp.append(((m >= S // D) & (m < (2 * S) // D), sh))
        S *= 2

    def compact(y):
        for msk, sh in comp:
            if sh:
                y = jnp.where(msk, pltpu.roll(y, _LANES - sh, 1), y)
        return y

    def chunk(c, carry):
        r0 = pl.multiple_of(c * _CS, _CS)
        x = x_ref[pl.ds(r0, _CS), :].astype(jnp.float32)
        p = prev_ref[pl.ds(r0, _CS), :].astype(jnp.float32)

        # -- transition log-prob at the ORIGINAL particles --------------------
        # (1/sqrt(2) is folded into cisig, so no -0.5 multiply is needed)
        mu = cA[0] * p
        for s in range(1, D):
            mu = mu + cA[s] * rotg(p, s)
        r = (x - mu) * cisig
        acc = logz - groupsum(r * r)

        # -- planar-flow stack: log|det J| via running product + single log ---
        det = None
        for i in range(k):
            lin = groupsum(cw[i] * x) + b_i[i]
            t = jnp.tanh(lin)
            x = x + cu[i] * t
            # phi.u = tanh'(lin) * (w.u)   (exact rewrite of the module math)
            f = jnp.abs(1.0 + (1.0 - t * t) * wu_i[i]) + 1e-4
            det = f if det is None else det * f
        if det is not None:
            acc = acc + jnp.log(det)

        out_ref[pl.ds(r0, _CS), :] = compact(acc)[:, :ppr].astype(out_ref.dtype)
        return carry

    lax.fori_loop(0, rows // _CS, chunk, 0, unroll=2)


def _round_up(x, m):
    return ((x + m - 1) // m) * m


def dynamic_cnf_forward(flow_params, trans_params, particles, previous_latents_bar,
                        *, target_block_rows=2048):
    """particles, previous_latents_bar: (B, N, D).  Returns dyn_log_prob (B, N)."""
    w_all, u_all, b_all = flow_params          # (k, D), (k, D), (k,)
    a_mat, sigma = trans_params                # (D, D), (D,)
    k, D = w_all.shape
    B, N, d2 = particles.shape
    assert d2 == D
    assert D <= _LANES and (D & (D - 1)) == 0, "latent dim must be a power of two"

    M = B * N
    ppr = _LANES // D
    rows_needed = -(-M // ppr)

    # grid sizing: even number of "parallel" steps (v7x megacore), big DMA tiles
    if rows_needed <= _CS:
        grid = 1
    else:
        grid = max(2, -(-rows_needed // target_block_rows))
        grid = _round_up(grid, 2)
    tr = _round_up(-(-rows_needed // grid), _CS)
    rows = tr * grid
    Mp = rows * ppr

    # Native-layout hand-off: (B,N,D) -> (M,D) -> (rows,128) is a free reshape
    # (no transpose, no extra HBM pass).  Dims are de-interleaved in-kernel.
    x2 = particles.reshape(M, D).astype(jnp.float32)
    p2 = previous_latents_bar.reshape(M, D).astype(jnp.float32)
    if Mp != M:   # pad only when the particle count is awkward
        x2 = jnp.pad(x2, ((0, Mp - M), (0, 0)))
        p2 = jnp.pad(p2, ((0, Mp - M), (0, 0)))
    xr = x2.reshape(rows, _LANES)
    pr = p2.reshape(rows, _LANES)

    # all tiny parameters packed into a single SMEM vector
    params = jnp.concatenate([
        w_all.reshape(-1).astype(jnp.float32),
        u_all.reshape(-1).astype(jnp.float32),
        b_all.reshape(-1).astype(jnp.float32),
        jnp.sum(w_all * u_all, axis=-1).reshape(-1).astype(jnp.float32),
        a_mat.reshape(-1).astype(jnp.float32),
        (1.0 / (sigma * jnp.sqrt(2.0))).astype(jnp.float32),
        (-jnp.sum(jnp.log(sigma)) - 0.5 * D * jnp.log(2.0 * jnp.pi)
         ).reshape(1).astype(jnp.float32),
    ])

    out = pl.pallas_call(
        functools.partial(_dynamic_cnf_kernel, k=k, dim=D),
        out_shape=jax.ShapeDtypeStruct((rows, ppr), jnp.float32),
        grid=(grid,),
        in_specs=[pl.BlockSpec(memory_space=pltpu.MemorySpace.SMEM),
                  pl.BlockSpec((tr, _LANES), lambda i: (i, 0)),
                  pl.BlockSpec((tr, _LANES), lambda i: (i, 0))],
        out_specs=pl.BlockSpec((tr, ppr), lambda i: (i, 0)),
        compiler_params=pltpu.CompilerParams(
            dimension_semantics=("parallel",)),
    )(params, xr, pr)

    return out.reshape(-1)[:M].reshape(B, N)


def reference_forward(flow_params, trans_params, particles, previous_latents_bar):
    """Plain-JAX transcription of Dynamic_cnf.forward (for correctness check)."""
    w_all, u_all, b_all = flow_params
    a_mat, sigma = trans_params
    B, N, dim = particles.shape
    k = w_all.shape[0]
    x = particles.reshape(-1, dim)
    log_det = jnp.zeros(x.shape[0], jnp.float32)
    for i in range(k):
        lin = x @ w_all[i] + b_all[i]
        t = jnp.tanh(lin)
        z = x + u_all[i][None, :] * t[:, None]
        phi = (1.0 - t * t)[:, None] * w_all[i][None, :]
        log_det = log_det + jnp.log(jnp.abs(1.0 + phi @ u_all[i]) + 1e-4)
        x = z
    log_det = log_det.reshape(B, N)
    mu = previous_latents_bar @ a_mat.T
    diff = (particles - mu) / sigma
    trans_lp = (-0.5 * jnp.sum(diff * diff, axis=-1)
                - jnp.sum(jnp.log(sigma))
                - 0.5 * dim * jnp.log(2.0 * jnp.pi))
    return trans_lp + log_det


if __name__ == "__main__":
    key = jax.random.PRNGKey(0)
    k_flows, dim = 2, 2            # n_sequence=2 planar flows, latent dim 2
    B, N = 2, 1024                 # batch, particles

    ks = jax.random.split(key, 7)
    bound = math.sqrt(1.0 / dim)
    w_all = jax.random.uniform(ks[0], (k_flows, dim), jnp.float32, -bound, bound)
    u_all = jax.random.uniform(ks[1], (k_flows, dim), jnp.float32, -bound, bound)
    b_all = jax.random.uniform(ks[2], (k_flows,), jnp.float32, -bound, bound)
    a_mat = (0.9 * jnp.eye(dim, dtype=jnp.float32)
             + 0.05 * jax.random.normal(ks[3], (dim, dim), jnp.float32))
    sigma = jax.random.uniform(ks[4], (dim,), jnp.float32, 0.2, 0.5)
    particles = jax.random.normal(ks[5], (B, N, dim), jnp.float32)
    previous_latents_bar = jax.random.normal(ks[6], (B, N, dim), jnp.float32)

    dyn_lp = dynamic_cnf_forward((w_all, u_all, b_all), (a_mat, sigma),
                                 particles, previous_latents_bar)
    dyn_lp = jax.block_until_ready(dyn_lp)

    ref = reference_forward((w_all, u_all, b_all), (a_mat, sigma),
                            particles, previous_latents_bar)
    assert dyn_lp.shape == (B, N)
    assert jnp.allclose(dyn_lp, ref, atol=1e-4, rtol=1e-4), \
        float(jnp.max(jnp.abs(dyn_lp - ref)))

    # small ragged case exercising the padding / single-step path
    B2, N2 = 1, 100
    p2 = jax.random.normal(jax.random.PRNGKey(1), (B2, N2, dim), jnp.float32)
    q2 = jax.random.normal(jax.random.PRNGKey(2), (B2, N2, dim), jnp.float32)
    out2 = jax.block_until_ready(
        dynamic_cnf_forward((w_all, u_all, b_all), (a_mat, sigma), p2, q2))
    ref2 = reference_forward((w_all, u_all, b_all), (a_mat, sigma), p2, q2)
    assert out2.shape == (B2, N2)
    assert jnp.allclose(out2, ref2, atol=1e-4, rtol=1e-4), \
        float(jnp.max(jnp.abs(out2 - ref2)))

    print("KERNEL_OK")
</pallas_src>

<mosaic_0001>
module attributes {stable_mosaic.version = 11 : i64} {
  func.func @_dynamic_cnf_kernel(%arg0: i32, %arg1: memref<19xf32, #tpu.memory_space<smem>>, %arg2: memref<16x128xf32, #tpu.memory_space<vmem>>, %arg3: memref<16x128xf32, #tpu.memory_space<vmem>>, %arg4: memref<16x64xf32, #tpu.memory_space<vmem>>) attributes {dimension_semantics = [#tpu.dimension_semantics<parallel>], iteration_bounds = array<i64: 2>, scalar_prefetch = 0 : i64, scratch_operands = 0 : i64, tpu.core_type = #tpu.core_type<tc>, window_params = [{transform_indices = @transform_0, window_bounds = array<i64: 19>}, {transform_indices = @transform_1, window_bounds = array<i64: 16, 128>}, {transform_indices = @transform_2, window_bounds = array<i64: 16, 128>}, {transform_indices = @transform_3, window_bounds = array<i64: 16, 64>}]} {
    %0 = tpu.iota {dimensions = array<i32: 1>} : vector<8x128xi32>
    %c1_i32 = arith.constant 1 : i32
    %1 = vector.broadcast %c1_i32 : i32 to vector<8x128xi32>
    %2 = arith.andi %0, %1 : vector<8x128xi32>
    %c16 = arith.constant 16 : index
    %3 = memref.load %arg1[%c16] : memref<19xf32, #tpu.memory_space<smem>>
    %4 = vector.broadcast %3 : f32 to vector<8x128xf32>
    %c1_i32_0 = arith.constant 1 : i32
    %5 = vector.broadcast %c1_i32_0 : i32 to vector<8x128xi32>
    %6 = arith.cmpi eq, %2, %5 : vector<8x128xi32>
    %c17 = arith.constant 17 : index
    %7 = memref.load %arg1[%c17] : memref<19xf32, #tpu.memory_space<smem>>
    %8 = vector.broadcast %7 : f32 to vector<8x128xf32>
    %9 = arith.select %6, %8, %4 : vector<8x128xi1>, vector<8x128xf32>
    %c12 = arith.constant 12 : index
    %10 = memref.load %arg1[%c12] : memref<19xf32, #tpu.memory_space<smem>>
    %11 = vector.broadcast %10 : f32 to vector<8x128xf32>
    %c1_i32_1 = arith.constant 1 : i32
    %12 = vector.broadcast %c1_i32_1 : i32 to vector<8x128xi32>
    %13 = arith.cmpi eq, %2, %12 : vector<8x128xi32>
    %c15 = arith.constant 15 : index
    %14 = memref.load %arg1[%c15] : memref<19xf32, #tpu.memory_space<smem>>
    %15 = vector.broadcast %14 : f32 to vector<8x128xf32>
    %16 = arith.select %13, %15, %11 : vector<8x128xi1>, vector<8x128xf32>
    %c13 = arith.constant 13 : index
    %17 = memref.load %arg1[%c13] : memref<19xf32, #tpu.memory_space<smem>>
    %18 = vector.broadcast %17 : f32 to vector<8x128xf32>
    %c1_i32_2 = arith.constant 1 : i32
    %19 = vector.broadcast %c1_i32_2 : i32 to vector<8x128xi32>
    %20 = arith.cmpi eq, %2, %19 : vector<8x128xi32>
    %c14 = arith.constant 14 : index
    %21 = memref.load %arg1[%c14] : memref<19xf32, #tpu.memory_space<smem>>
    %22 = vector.broadcast %21 : f32 to vector<8x128xf32>
    %23 = arith.select %20, %22, %18 : vector<8x128xi1>, vector<8x128xf32>
    %c0 = arith.constant 0 : index
    %24 = memref.load %arg1[%c0] : memref<19xf32, #tpu.memory_space<smem>>
    %25 = vector.broadcast %24 : f32 to vector<8x128xf32>
    %c1_i32_3 = arith.constant 1 : i32
    %26 = vector.broadcast %c1_i32_3 : i32 to vector<8x128xi32>
    %27 = arith.cmpi eq, %2, %26 : vector<8x128xi32>
    %c1 = arith.constant 1 : index
    %28 = memref.load %arg1[%c1] : memref<19xf32, #tpu.memory_space<smem>>
    %29 = vector.broadcast %28 : f32 to vector<8x128xf32>
    %30 = arith.select %27, %29, %25 : vector<8x128xi1>, vector<8x128xf32>
    %c2 = arith.constant 2 : index
    %31 = memref.load %arg1[%c2] : memref<19xf32, #tpu.memory_space<smem>>
    %32 = vector.broadcast %31 : f32 to vector<8x128xf32>
    %c1_i32_4 = arith.constant 1 : i32
    %33 = vector.broadcast %c1_i32_4 : i32 to vector<8x128xi32>
    %34 = arith.cmpi eq, %2, %33 : vector<8x128xi32>
    %c3 = arith.constant 3 : index
    %35 = memref.load %arg1[%c3] : memref<19xf32, #tpu.memory_space<smem>>
    %36 = vector.broadcast %35 : f32 to vector<8x128xf32>
    %37 = arith.select %34, %36, %32 : vector<8x128xi1>, vector<8x128xf32>
    %c4 = arith.constant 4 : index
    %38 = memref.load %arg1[%c4] : memref<19xf32, #tpu.memory_space<smem>>
    %39 = vector.broadcast %38 : f32 to vector<8x128xf32>
    %c1_i32_5 = arith.constant 1 : i32
    %40 = vector.broadcast %c1_i32_5 : i32 to vector<8x128xi32>
    %41 = arith.cmpi eq, %2, %40 : vector<8x128xi32>
    %c5 = arith.constant 5 : index
    %42 = memref.load %arg1[%c5] : memref<19xf32, #tpu.memory_space<smem>>
    %43 = vector.broadcast %42 : f32 to vector<8x128xf32>
    %44 = arith.select %41, %43, %39 : vector<8x128xi1>, vector<8x128xf32>
    %c8 = arith.constant 8 : index
    %45 = memref.load %arg1[%c8] : memref<19xf32, #tpu.memory_space<smem>>
    %c9 = arith.constant 9 : index
    %46 = memref.load %arg1[%c9] : memref<19xf32, #tpu.memory_space<smem>>
    %c10 = arith.constant 10 : index
    %47 = memref.load %arg1[%c10] : memref<19xf32, #tpu.memory_space<smem>>
    %c11 = arith.constant 11 : index
    %48 = memref.load %arg1[%c11] : memref<19xf32, #tpu.memory_space<smem>>
    %c18 = arith.constant 18 : index
    %49 = memref.load %arg1[%c18] : memref<19xf32, #tpu.memory_space<smem>>
    %c1_i32_6 = arith.constant 1 : i32
    %50 = vector.broadcast %c1_i32_6 : i32 to vector<8x128xi32>
    %51 = arith.cmpi slt, %2, %50 : vector<8x128xi32>
    %c3_i32 = arith.constant 3 : i32
    %52 = vector.broadcast %c3_i32 : i32 to vector<8x128xi32>
    %53 = arith.andi %0, %52 : vector<8x128xi32>
    %c1_i32_7 = arith.constant 1 : i32
    %54 = vector.broadcast %c1_i32_7 : i32 to vector<8x128xi32>
    %55 = arith.cmpi sge, %53, %54 : vector<8x128xi32>
    %c2_i32 = arith.constant 2 : i32
    %56 = vector.broadcast %c2_i32 : i32 to vector<8x128xi32>
    %57 = arith.cmpi slt, %53, %56 : vector<8x128xi32>
    %58 = arith.andi %55, %57 : vector<8x128xi1>
    %c7_i32 = arith.constant 7 : i32
    %59 = vector.broadcast %c7_i32 : i32 to vector<8x128xi32>
    %60 = arith.andi %0, %59 : vector<8x128xi32>
    %c2_i32_8 = arith.constant 2 : i32
    %61 = vector.broadcast %c2_i32_8 : i32 to vector<8x128xi32>
    %62 = arith.cmpi sge, %60, %61 : vector<8x128xi32>
    %c4_i32 = arith.constant 4 : i32
    %63 = vector.broadcast %c4_i32 : i32 to vector<8x128xi32>
    %64 = arith.cmpi slt, %60, %63 : vector<8x128xi32>
    %65 = arith.andi %62, %64 : vector<8x128xi1>
    %c15_i32 = arith.constant 15 : i32
    %66 = vector.broadcast %c15_i32 : i32 to vector<8x128xi32>
    %67 = arith.andi %0, %66 : vector<8x128xi32>
    %c4_i32_9 = arith.constant 4 : i32
    %68 = vector.broadcast %c4_i32_9 : i32 to vector<8x128xi32>
    %69 = arith.cmpi sge, %67, %68 : vector<8x128xi32>
    %c8_i32 = arith.constant 8 : i32
    %70 = vector.broadcast %c8_i32 : i32 to vector<8x128xi32>
    %71 = arith.cmpi slt, %67, %70 : vector<8x128xi32>
    %72 = arith.andi %69, %71 : vector<8x128xi1>
    %c31_i32 = arith.constant 31 : i32
    %73 = vector.broadcast %c31_i32 : i32 to vector<8x128xi32>
    %74 = arith.andi %0, %73 : vector<8x128xi32>
    %c8_i32_10 = arith.constant 8 : i32
    %75 = vector.broadcast %c8_i32_10 : i32 to vector<8x128xi32>
    %76 = arith.cmpi sge, %74, %75 : vector<8x128xi32>
    %c16_i32 = arith.constant 16 : i32
    %77 = vector.broadcast %c16_i32 : i32 to vector<8x128xi32>
    %78 = arith.cmpi slt, %74, %77 : vector<8x128xi32>
    %79 = arith.andi %76, %78 : vector<8x128xi1>
    %c63_i32 = arith.constant 63 : i32
    %80 = vector.broadcast %c63_i32 : i32 to vector<8x128xi32>
    %81 = arith.andi %0, %80 : vector<8x128xi32>
    %c16_i32_11 = arith.constant 16 : i32
    %82 = vector.broadcast %c16_i32_11 : i32 to vector<8x128xi32>
    %83 = arith.cmpi sge, %81, %82 : vector<8x128xi32>
    %c32_i32 = arith.constant 32 : i32
    %84 = vector.broadcast %c32_i32 : i32 to vector<8x128xi32>
    %85 = arith.cmpi slt, %81, %84 : vector<8x128xi32>
    %86 = arith.andi %83, %85 : vector<8x128xi1>
    %c127_i32 = arith.constant 127 : i32
    %87 = vector.broadcast %c127_i32 : i32 to vector<8x128xi32>
    %88 = arith.andi %0, %87 : vector<8x128xi32>
    %c32_i32_12 = arith.constant 32 : i32
    %89 = vector.broadcast %c32_i32_12 : i32 to vector<8x128xi32>
    %90 = arith.cmpi sge, %88, %89 : vector<8x128xi32>
    %c64_i32 = arith.constant 64 : i32
    %91 = vector.broadcast %c64_i32 : i32 to vector<8x128xi32>
    %92 = arith.cmpi slt, %88, %91 : vector<8x128xi32>
    %93 = arith.andi %90, %92 : vector<8x128xi1>
    %c0_i32 = arith.constant 0 : i32
    %c8_i32_13 = arith.constant 8 : i32
    %94 = arith.muli %c0_i32, %c8_i32_13 : i32
    %95 = tpu.assume_multiple %94, 8 : i32
    %96 = arith.index_cast %95 : i32 to index
    %c0_14 = arith.constant 0 : index
    %97 = vector.load %arg2[%96, %c0_14] : memref<16x128xf32, #tpu.memory_space<vmem>>, vector<8x128xf32>
    %98 = arith.index_cast %95 : i32 to index
    %c0_15 = arith.constant 0 : index
    %99 = vector.load %arg3[%98, %c0_15] : memref<16x128xf32, #tpu.memory_space<vmem>>, vector<8x128xf32>
    %100 = arith.mulf %16, %99 : vector<8x128xf32>
    %c127_i32_16 = arith.constant 127 : i32
    %101 = tpu.dynamic_rotate %99 by %c127_i32_16 dim 1 : vector<8x128xf32>, i32 -> vector<8x128xf32>
    %c1_i32_17 = arith.constant 1 : i32
    %102 = tpu.dynamic_rotate %99 by %c1_i32_17 dim 1 : vector<8x128xf32>, i32 -> vector<8x128xf32>
    %103 = arith.select %51, %101, %102 : vector<8x128xi1>, vector<8x128xf32>
    %104 = arith.mulf %23, %103 : vector<8x128xf32>
    %105 = arith.addf %100, %104 : vector<8x128xf32>
    %106 = arith.subf %97, %105 : vector<8x128xf32>
    %107 = arith.mulf %106, %9 : vector<8x128xf32>
    %108 = arith.mulf %107, %107 : vector<8x128xf32>
    %c127_i32_18 = arith.constant 127 : i32
    %109 = tpu.dynamic_rotate %108 by %c127_i32_18 dim 1 : vector<8x128xf32>, i32 -> vector<8x128xf32>
    %c1_i32_19 = arith.constant 1 : i32
    %110 = tpu.dynamic_rotate %108 by %c1_i32_19 dim 1 : vector<8x128xf32>, i32 -> vector<8x128xf32>
    %111 = arith.select %51, %109, %110 : vector<8x128xi1>, vector<8x128xf32>
    %112 = arith.addf %108, %111 : vector<8x128xf32>
    %113 = vector.broadcast %49 : f32 to vector<8x128xf32>
    %114 = arith.subf %113, %112 : vector<8x128xf32>
    %115 = arith.mulf %30, %97 : vector<8x128xf32>
    %c127_i32_20 = arith.constant 127 : i32
    %116 = tpu.dynamic_rotate %115 by %c127_i32_20 dim 1 : vector<8x128xf32>, i32 -> vector<8x128xf32>
    %c1_i32_21 = arith.constant 1 : i32
    %117 = tpu.dynamic_rotate %115 by %c1_i32_21 dim 1 : vector<8x128xf32>, i32 -> vector<8x128xf32>
    %118 = arith.select %51, %116, %117 : vector<8x128xi1>, vector<8x128xf32>
    %119 = arith.addf %115, %118 : vector<8x128xf32>
    %120 = vector.broadcast %45 : f32 to vector<8x128xf32>
    %121 = arith.addf %119, %120 : vector<8x128xf32>
    %122 = math.tanh %121 : vector<8x128xf32>
    %123 = arith.mulf %44, %122 : vector<8x128xf32>
    %124 = arith.addf %97, %123 : vector<8x128xf32>
    %125 = arith.mulf %122, %122 : vector<8x128xf32>
    %cst = arith.constant 1.000000e+00 : f32
    %126 = vector.broadcast %cst : f32 to vector<8x128xf32>
    %127 = arith.subf %126, %125 : vector<8x128xf32>
    %128 = vector.broadcast %47 : f32 to vector<8x128xf32>
    %129 = arith.mulf %127, %128 : vector<8x128xf32>
    %cst_22 = arith.constant 1.000000e+00 : f32
    %130 = vector.broadcast %cst_22 : f32 to vector<8x128xf32>
    %131 = arith.addf %130, %129 : vector<8x128xf32>
    %132 = math.absf %131 : vector<8x128xf32>
    %cst_23 = arith.constant 9.99999974E-5 : f32
    %133 = vector.broadcast %cst_23 : f32 to vector<8x128xf32>
    %134 = arith.addf %132, %133 : vector<8x128xf32>
    %135 = arith.mulf %37, %124 : vector<8x128xf32>
    %c127_i32_24 = arith.constant 127 : i32
    %136 = tpu.dynamic_rotate %135 by %c127_i32_24 dim 1 : vector<8x128xf32>, i32 -> vector<8x128xf32>
    %c1_i32_25 = arith.constant 1 : i32
    %137 = tpu.dynamic_rotate %135 by %c1_i32_25 dim 1 : vector<8x128xf32>, i32 -> vector<8x128xf32>
    %138 = arith.select %51, %136, %137 : vector<8x128xi1>, vector<8x128xf32>
    %139 = arith.addf %135, %138 : vector<8x128xf32>
    %140 = vector.broadcast %46 : f32 to vector<8x128xf32>
    %141 = arith.addf %139, %140 : vector<8x128xf32>
    %142 = math.tanh %141 : vector<8x128xf32>
    %143 = arith.mulf %142, %142 : vector<8x128xf32>
    %cst_26 = arith.constant 1.000000e+00 : f32
    %144 = vector.broadcast %cst_26 : f32 to vector<8x128xf32>
    %145 = arith.subf %144, %143 : vector<8x128xf32>
    %146 = vector.broadcast %48 : f32 to vector<8x128xf32>
    %147 = arith.mulf %145, %146 : vector<8x128xf32>
    %cst_27 = arith.constant 1.000000e+00 : f32
    %148 = vector.broadcast %cst_27 : f32 to vector<8x128xf32>
    %149 = arith.addf %148, %147 : vector<8x128xf32>
    %150 = math.absf %149 : vector<8x128xf32>
    %cst_28 = arith.constant 9.99999974E-5 : f32
    %151 = vector.broadcast %cst_28 : f32 to vector<8x128xf32>
    %152 = arith.addf %150, %151 : vector<8x128xf32>
    %153 = arith.mulf %134, %152 : vector<8x128xf32>
    %154 = math.log %153 : vector<8x128xf32>
    %155 = arith.addf %114, %154 : vector<8x128xf32>
    %c127_i32_29 = arith.constant 127 : i32
    %156 = tpu.dynamic_rotate %155 by %c127_i32_29 dim 1 : vector<8x128xf32>, i32 -> vector<8x128xf32>
    %157 = arith.select %58, %156, %155 : vector<8x128xi1>, vector<8x128xf32>
    %c126_i32 = arith.constant 126 : i32
    %158 = tpu.dynamic_rotate %157 by %c126_i32 dim 1 : vector<8x128xf32>, i32 -> vector<8x128xf32>
    %159 = arith.select %65, %158, %157 : vector<8x128xi1>, vector<8x128xf32>
    %c124_i32 = arith.constant 124 : i32
    %160 = tpu.dynamic_rotate %159 by %c124_i32 dim 1 : vector<8x128xf32>, i32 -> vector<8x128xf32>
    %161 = arith.select %72, %160, %159 : vector<8x128xi1>, vector<8x128xf32>
    %c120_i32 = arith.constant 120 : i32
    %162 = tpu.dynamic_rotate %161 by %c120_i32 dim 1 : vector<8x128xf32>, i32 -> vector<8x128xf32>
    %163 = arith.select %79, %162, %161 : vector<8x128xi1>, vector<8x128xf32>
    %c112_i32 = arith.constant 112 : i32
    %164 = tpu.dynamic_rotate %163 by %c112_i32 dim 1 : vector<8x128xf32>, i32 -> vector<8x128xf32>
    %165 = arith.select %86, %164, %163 : vector<8x128xi1>, vector<8x128xf32>
    %c96_i32 = arith.constant 96 : i32
    %166 = tpu.dynamic_rotate %165 by %c96_i32 dim 1 : vector<8x128xf32>, i32 -> vector<8x128xf32>
    %167 = arith.select %93, %166, %165 : vector<8x128xi1>, vector<8x128xf32>
    %168 = vector.extract_strided_slice %167 {offsets = [0, 0], sizes = [8, 64], strides = [1, 1]} : vector<8x128xf32> to vector<8x64xf32>
    %169 = arith.index_cast %95 : i32 to index
    %c0_30 = arith.constant 0 : index
    %170 = vector.load %arg4[%169, %c0_30] : memref<16x64xf32, #tpu.memory_space<vmem>>, vector<8x64xf32>
    tpu.vector_store %arg4[%169, %c0_30], %168 {strides = array<i32>} : memref<16x64xf32, #tpu.memory_space<vmem>>, vector<8x64xf32>,
    %c1_i32_31 = arith.constant 1 : i32
    %c8_i32_32 = arith.constant 8 : i32
    %171 = arith.muli %c1_i32_31, %c8_i32_32 : i32
    %172 = tpu.assume_multiple %171, 8 : i32
    %173 = arith.index_cast %172 : i32 to index
    %c0_33 = arith.constant 0 : index
    %174 = vector.load %arg2[%173, %c0_33] : memref<16x128xf32, #tpu.memory_space<vmem>>, vector<8x128xf32>
    %175 = arith.index_cast %172 : i32 to index
    %c0_34 = arith.constant 0 : index
    %176 = vector.load %arg3[%175, %c0_34] : memref<16x128xf32, #tpu.memory_space<vmem>>, vector<8x128xf32>
    %177 = arith.mulf %16, %176 : vector<8x128xf32>
    %c127_i32_35 = arith.constant 127 : i32
    %178 = tpu.dynamic_rotate %176 by %c127_i32_35 dim 1 : vector<8x128xf32>, i32 -> vector<8x128xf32>
    %c1_i32_36 = arith.constant 1 : i32
    %179 = tpu.dynamic_rotate %176 by %c1_i32_36 dim 1 : vector<8x128xf32>, i32 -> vector<8x128xf32>
    %180 = arith.select %51, %178, %179 : vector<8x128xi1>, vector<8x128xf32>
    %181 = arith.mulf %23, %180 : vector<8x128xf32>
    %182 = arith.addf %177, %181 : vector<8x128xf32>
    %183 = arith.subf %174, %182 : vector<8x128xf32>
    %184 = arith.mulf %183, %9 : vector<8x128xf32>
    %185 = arith.mulf %184, %184 : vector<8x128xf32>
    %c127_i32_37 = arith.constant 127 : i32
    %186 = tpu.dynamic_rotate %185 by %c127_i32_37 dim 1 : vector<8x128xf32>, i32 -> vector<8x128xf32>
    %c1_i32_38 = arith.constant 1 : i32
    %187 = tpu.dynamic_rotate %185 by %c1_i32_38 dim 1 : vector<8x128xf32>, i32 -> vector<8x128xf32>
    %188 = arith.select %51, %186, %187 : vector<8x128xi1>, vector<8x128xf32>
    %189 = arith.addf %185, %188 : vector<8x128xf32>
    %190 = vector.broadcast %49 : f32 to vector<8x128xf32>
    %191 = arith.subf %190, %189 : vector<8x128xf32>
    %192 = arith.mulf %30, %174 : vector<8x128xf32>
    %c127_i32_39 = arith.constant 127 : i32
    %193 = tpu.dynamic_rotate %192 by %c127_i32_39 dim 1 : vector<8x128xf32>, i32 -> vector<8x128xf32>
    %c1_i32_40 = arith.constant 1 : i32
    %194 = tpu.dynamic_rotate %192 by %c1_i32_40 dim 1 : vector<8x128xf32>, i32 -> vector<8x128xf32>
    %195 = arith.select %51, %193, %194 : vector<8x128xi1>, vector<8x128xf32>
    %196 = arith.addf %192, %195 : vector<8x128xf32>
    %197 = vector.broadcast %45 : f32 to vector<8x128xf32>
    %198 = arith.addf %196, %197 : vector<8x128xf32>
    %199 = math.tanh %198 : vector<8x128xf32>
    %200 = arith.mulf %44, %199 : vector<8x128xf32>
    %201 = arith.addf %174, %200 : vector<8x128xf32>
    %202 = arith.mulf %199, %199 : vector<8x128xf32>
    %cst_41 = arith.constant 1.000000e+00 : f32
    %203 = vector.broadcast %cst_41 : f32 to vector<8x128xf32>
    %204 = arith.subf %203, %202 : vector<8x128xf32>
    %205 = vector.broadcast %47 : f32 to vector<8x128xf32>
    %206 = arith.mulf %204, %205 : vector<8x128xf32>
    %cst_42 = arith.constant 1.000000e+00 : f32
    %207 = vector.broadcast %cst_42 : f32 to vector<8x128xf32>
    %208 = arith.addf %207, %206 : vector<8x128xf32>
    %209 = math.absf %208 : vector<8x128xf32>
    %cst_43 = arith.constant 9.99999974E-5 : f32
    %210 = vector.broadcast %cst_43 : f32 to vector<8x128xf32>
    %211 = arith.addf %209, %210 : vector<8x128xf32>
    %212 = arith.mulf %37, %201 : vector<8x128xf32>
    %c127_i32_44 = arith.constant 127 : i32
    %213 = tpu.dynamic_rotate %212 by %c127_i32_44 dim 1 : vector<8x128xf32>, i32 -> vector<8x128xf32>
    %c1_i32_45 = arith.constant 1 : i32
    %214 = tpu.dynamic_rotate %212 by %c1_i32_45 dim 1 : vector<8x128xf32>, i32 -> vector<8x128xf32>
    %215 = arith.select %51, %213, %214 : vector<8x128xi1>, vector<8x128xf32>
    %216 = arith.addf %212, %215 : vector<8x128xf32>
    %217 = vector.broadcast %46 : f32 to vector<8x128xf32>
    %218 = arith.addf %216, %217 : vector<8x128xf32>
    %219 = math.tanh %218 : vector<8x128xf32>
    %220 = arith.mulf %219, %219 : vector<8x128xf32>
    %cst_46 = arith.constant 1.000000e+00 : f32
    %221 = vector.broadcast %cst_46 : f32 to vector<8x128xf32>
    %222 = arith.subf %221, %220 : vector<8x128xf32>
    %223 = vector.broadcast %48 : f32 to vector<8x128xf32>
    %224 = arith.mulf %222, %223 : vector<8x128xf32>
    %cst_47 = arith.constant 1.000000e+00 : f32
    %225 = vector.broadcast %cst_47 : f32 to vector<8x128xf32>
    %226 = arith.addf %225, %224 : vector<8x128xf32>
    %227 = math.absf %226 : vector<8x128xf32>
    %cst_48 = arith.constant 9.99999974E-5 : f32
    %228 = vector.broadcast %cst_48 : f32 to vector<8x128xf32>
    %229 = arith.addf %227, %228 : vector<8x128xf32>
    %230 = arith.mulf %211, %229 : vector<8x128xf32>
    %231 = math.log %230 : vector<8x128xf32>
    %232 = arith.addf %191, %231 : vector<8x128xf32>
    %c127_i32_49 = arith.constant 127 : i32
    %233 = tpu.dynamic_rotate %232 by %c127_i32_49 dim 1 : vector<8x128xf32>, i32 -> vector<8x128xf32>
    %234 = arith.select %58, %233, %232 : vector<8x128xi1>, vector<8x128xf32>
    %c126_i32_50 = arith.constant 126 : i32
    %235 = tpu.dynamic_rotate %234 by %c126_i32_50 dim 1 : vector<8x128xf32>, i32 -> vector<8x128xf32>
    %236 = arith.select %65, %235, %234 : vector<8x128xi1>, vector<8x128xf32>
    %c124_i32_51 = arith.constant 124 : i32
    %237 = tpu.dynamic_rotate %236 by %c124_i32_51 dim 1 : vector<8x128xf32>, i32 -> vector<8x128xf32>
    %238 = arith.select %72, %237, %236 : vector<8x128xi1>, vector<8x128xf32>
    %c120_i32_52 = arith.constant 120 : i32
    %239 = tpu.dynamic_rotate %238 by %c120_i32_52 dim 1 : vector<8x128xf32>, i32 -> vector<8x128xf32>
    %240 = arith.select %79, %239, %238 : vector<8x128xi1>, vector<8x128xf32>
    %c112_i32_53 = arith.constant 112 : i32
    %241 = tpu.dynamic_rotate %240 by %c112_i32_53 dim 1 : vector<8x128xf32>, i32 -> vector<8x128xf32>
    %242 = arith.select %86, %241, %240 : vector<8x128xi1>, vector<8x128xf32>
    %c96_i32_54 = arith.constant 96 : i32
    %243 = tpu.dynamic_rotate %242 by %c96_i32_54 dim 1 : vector<8x128xf32>, i32 -> vector<8x128xf32>
    %244 = arith.select %93, %243, %242 : vector<8x128xi1>, vector<8x128xf32>
    %245 = vector.extract_strided_slice %244 {offsets = [0, 0], sizes = [8, 64], strides = [1, 1]} : vector<8x128xf32> to vector<8x64xf32>
    %246 = arith.index_cast %172 : i32 to index
    %c0_55 = arith.constant 0 : index
    %247 = vector.load %arg4[%246, %c0_55] : memref<16x64xf32, #tpu.memory_space<vmem>>, vector<8x64xf32>
    tpu.vector_store %arg4[%246, %c0_55], %245 {strides = array<i32>} : memref<16x64xf32, #tpu.memory_space<vmem>>, vector<8x64xf32>,
    %c2_i32_56 = arith.constant 2 : i32
    return
  }
  func.func @transform_0(%arg0: i32) -> i32 {
    %c0_i32 = arith.constant 0 : i32
    %c0_i32_0 = arith.constant 0 : i32
    return %c0_i32 : i32
  }
  func.func @transform_1(%arg0: i32) -> (i32, i32) {
    %c0_i32 = arith.constant 0 : i32
    %c0_i32_0 = arith.constant 0 : i32
    return %arg0, %c0_i32 : i32, i32
  }
  func.func @transform_2(%arg0: i32) -> (i32, i32) {
    %c0_i32 = arith.constant 0 : i32
    %c0_i32_0 = arith.constant 0 : i32
    return %arg0, %c0_i32 : i32, i32
  }
  func.func @transform_3(%arg0: i32) -> (i32, i32) {
    %c0_i32 = arith.constant 0 : i32
    %c0_i32_0 = arith.constant 0 : i32
    return %arg0, %c0_i32 : i32, i32
  }
}

</mosaic_0001>

<llo_original>
// kernel: tpu_custom_call.1
$region0: #{tpu_custom_call.1}
  #allocation0 [shape = 'u32[]', space=smem, size = 0x4, offset = 0x4, fixed_abs, tag = 'smem constant byte address 0x4 - core index']
  #allocation1 [shape = 'u32[144,128]{1,0:T(1,128)}', space=vmem, size = 0x12000, scoped, tag = 'internal scratch']
  %s0 = inlined_call_operand.hbm [shape: f32[19], index: 0, kind: input, shape index: {}]
  %s1 = inlined_call_operand.hbm [shape: f32[32,128], index: 1, kind: input, shape index: {}]
  %s2 = inlined_call_operand.hbm [shape: f32[32,128], index: 2, kind: input, shape index: {}]
  %s3 = inlined_call_operand.hbm [shape: f32[32,64], index: 3, kind: output, shape index: {}]
  %s4 = sld [smem:[#allocation0]]
  $region57: #{tpu_custom_call.1} parent=0
    _
  %s6 = ssub.s32 1, %s4
  %s7 = scalar_select 0, %s6, %s4
  $region1: #{tpu_custom_call.1} parent=0
    #allocation2 [shape = 'u8[512]{0}', space=smem, size = 0x200, scoped, tag = 'input window, operand 0, single buffered']
    #allocation3 [shape = 's32[2]{0}', space=sflag, size = 0x8, scoped, tag = 'scoped memory for tpu_custom_call.1']
    #allocation4 [shape = 's32[2]{0}', space=sflag, size = 0x8, scoped, tag = 'scoped memory for tpu_custom_call.1']
    #allocation5 [shape = 's32[2]{0}', space=sflag, size = 0x8, scoped, tag = 'scoped memory for tpu_custom_call.1']
    #allocation6 [shape = 'u8[16384]{0}', space=vmem, size = 0x4000, scoped, tag = 'input window, operand 1']
    #allocation7 [shape = 'u8[16384]{0}', space=vmem, size = 0x4000, scoped, tag = 'input window, operand 2']
    #allocation8 [shape = 's32[2]{0}', space=sflag, size = 0x8, scoped, tag = 'scoped memory for tpu_custom_call.1']
    #allocation9 [shape = 'u8[16384]{0}', space=vmem, size = 0x4000, scoped, tag = 'output window, operand 0']
    %8 = vsyncpa [#allocation5], 0
    %9 = vsyncpa [#allocation3], 0
    %s10 = scalar_lea.sflag [#allocation3], 1
    %11 = vsyncpa %s10, 0
    %12 = vsyncpa [#allocation8], 0
    %s13 = scalar_lea.sflag [#allocation8], 1
    %14 = vsyncpa %s13, 0
    %15 = vsyncpa [#allocation4], 0
    %s16 = scalar_lea.sflag [#allocation4], 1
    %17 = vsyncpa %s16, 0
    loop: start=0, step=1, limit=4
    $region2: #{tpu_custom_call.1} parent=1 // loop_pre_header
      _
    $region3: #{tpu_custom_call.1} parent=1 // loop_header
      %s19 = sphi 0, %s23
      %p20 = scmp.ge.s32.totalorder %s19, 4
      %s27 = sphi 0, %s27
      %s29 = sphi 0, %s27
      %s30 = sphi 0, %s29
      %s44 = sphi 0, %s30
      %s50 = sphi 0, %s52
      %s53 = sphi 0, %s50
      %s54 = sphi 0, %s53
      %s70 = sphi 0, %s54
      %s76 = sphi 0, %s78
      %s79 = sphi 0, %s76
      %s80 = sphi 0, %s79
      %s96 = sphi 0, %s80
      %s102 = sphi 0, %s104
      %s105 = sphi 0, %s102
      %s106 = sphi 0, %s105
      %s122 = sphi 0, %s106
    $region4: #{tpu_custom_call.1} parent=1 // loop_header_branch
      %22 = sbr.rel (%p20) target = $region8
    $region5: #{tpu_custom_call.1} parent=1 // loop_body
      %s24 = ssub.s32 %s19, 1
      %s25 = ssub.s32 %s19, 2
      %s26 = sadd.s32 %s19, 1
      %s28 = sadd.s32 %s27, 1
      %p31 = scmp.eq.s32.totalorder %s19, 1
      %p32 = scmp.ne.s32.totalorder %s27, %s29
      %p33 = scmp.eq.s32.totalorder %s19, 0
      %p34 = por %p32, %p33
      %p35 = scmp.ne.s32.totalorder %s27, %s29
      %p36 = scmp.eq.s32.totalorder %s24, 1
      %p37 = por %p35, %p36
      %p38 = scmp.ne.s32.totalorder %s29, %s30
      %p39 = scmp.eq.s32.totalorder %s24, 0
      %p40 = por %p38, %p39
      %p41 = scmp.ne.s32.totalorder %s29, %s30
      %p42 = scmp.eq.s32.totalorder %s25, 1
      %p43 = por %p41, %p42
      %p45 = scmp.ne.s32.totalorder %s30, %s44
      %p46 = scmp.eq.s32.totalorder %s25, 0
      %p47 = por %p45, %p46
      %s48 = ssub.s32 %s19, %s26
      %p49 = scmp.eq.s32.totalorder %s48, 0
      %s51 = sadd.s32 %s50, 1
      %s52 = scalar_select %p49, %s50, %s51
      %p55 = pneg %p49
      %p56 = scmp.eq.s32.totalorder %s19, 1
      %p57 = por %p55, %p56
      %p58 = scmp.ne.s32.totalorder %s50, %s53
      %p59 = scmp.eq.s32.totalorder %s19, 0
      %p60 = por %p58, %p59
      %p61 = scmp.ne.s32.totalorder %s50, %s53
      %p62 = scmp.eq.s32.totalorder %s24, 1
      %p63 = por %p61, %p62
      %p64 = scmp.ne.s32.totalorder %s53, %s54
      %p65 = scmp.eq.s32.totalorder %s24, 0
      %p66 = por %p64, %p65
      %p67 = scmp.ne.s32.totalorder %s53, %s54
      %p68 = scmp.eq.s32.totalorder %s25, 1
      %p69 = por %p67, %p68
      %p71 = scmp.ne.s32.totalorder %s54, %s70
      %p72 = scmp.eq.s32.totalorder %s25, 0
      %p73 = por %p71, %p72
      %s74 = ssub.s32 %s19, %s26
      %p75 = scmp.eq.s32.totalorder %s74, 0
      %s77 = sadd.s32 %s76, 1
      %s78 = scalar_select %p75, %s76, %s77
      %p81 = pneg %p75
      %p82 = scmp.eq.s32.totalorder %s19, 1
      %p83 = por %p81, %p82
      %p84 = scmp.ne.s32.totalorder %s76, %s79
      %p85 = scmp.eq.s32.totalorder %s19, 0
      %p86 = por %p84, %p85
      %p87 = scmp.ne.s32.totalorder %s76, %s79
      %p88 = scmp.eq.s32.totalorder %s24, 1
      %p89 = por %p87, %p88
      %p90 = scmp.ne.s32.totalorder %s79, %s80
      %p91 = scmp.eq.s32.totalorder %s24, 0
      %p92 = por %p90, %p91
      %p93 = scmp.ne.s32.totalorder %s79, %s80
      %p94 = scmp.eq.s32.totalorder %s25, 1
      %p95 = por %p93, %p94
      %p97 = scmp.ne.s32.totalorder %s80, %s96
      %p98 = scmp.eq.s32.totalorder %s25, 0
      %p99 = por %p97, %p98
      %s100 = ssub.s32 %s19, %s26
      %p101 = scmp.eq.s32.totalorder %s100, 0
      %s103 = sadd.s32 %s102, 1
      %s104 = scalar_select %p101, %s102, %s103
      %p107 = pneg %p101
      %p108 = scmp.eq.s32.totalorder %s19, 1
      %p109 = por %p107, %p108
      %p110 = scmp.ne.s32.totalorder %s102, %s105
      %p111 = scmp.eq.s32.totalorder %s19, 0
      %p112 = por %p110, %p111
      %p113 = scmp.ne.s32.totalorder %s102, %s105
      %p114 = scmp.eq.s32.totalorder %s24, 1
      %p115 = por %p113, %p114
      %p116 = scmp.ne.s32.totalorder %s105, %s106
      %p117 = scmp.eq.s32.totalorder %s24, 0
      %p118 = por %p116, %p117
      %p119 = scmp.ne.s32.totalorder %s105, %s106
      %p120 = scmp.eq.s32.totalorder %s25, 1
      %p121 = por %p119, %p120
      %p123 = scmp.ne.s32.totalorder %s106, %s122
      %p124 = scmp.eq.s32.totalorder %s25, 0
      %p125 = por %p123, %p124
      %p126 = scmp.le.s32.totalorder 1, %s19
      %p127 = scmp.lt.s32.totalorder %s19, 3
      %p128 = pnand %p126, %p127
      %p129 = pneg %p128
      // Predicated region
      $region9: #{tpu_custom_call.1} parent=5 // pred_check
        _
      $region10: #{tpu_custom_call.1} parent=5 // pred_check_branch
        %131 = sbr.rel (%p128) target = $region12
      $region11: #{tpu_custom_call.1} parent=5 // pred_region
        %s132 = ssub.s32 %s19, 1
        // Predicated region
        $region13: #{tpu_custom_call.1} parent=11 // pred_check
          %p133 = pneg %p40
        $region14: #{tpu_custom_call.1} parent=11 // pred_check_branch
          %135 = sbr.rel (%p133) target = $region16
        $region15: #{tpu_custom_call.1} parent=11 // pred_region
          %s137 = ssub.s32 16, 16
          %138 = vsyncadd [#allocation5], %s137
          %141 = dma.hbm_to_smem %s0, 16, [#allocation2], [#allocation5]
        $region16: #{tpu_custom_call.1} parent=11 // pred_fallthru
          _
      $region12: #{tpu_custom_call.1} parent=5 // pred_fallthru
        _
      %p142 = scmp.lt.s32.totalorder %s19, 2
      // Predicated region
      $region17: #{tpu_custom_call.1} parent=5 // pred_check
        %p143 = pneg %p142
      $region18: #{tpu_custom_call.1} parent=5 // pred_check_branch
        %145 = sbr.rel (%p143) target = $region20
      $region19: #{tpu_custom_call.1} parent=5 // pred_region
        // Predicated region
        $region21: #{tpu_custom_call.1} parent=19 // pred_check
          %p146 = pneg %p60
        $region22: #{tpu_custom_call.1} parent=19 // pred_check_branch
          %148 = sbr.rel (%p146) target = $region24
        $region23: #{tpu_custom_call.1} parent=19 // pred_region
          %s149 = sand.u32 %s50, 1
          %s150 = scalar_lea.sflag [#allocation3], %s149
          %s151 = sand.u32 %s50, 1
          %s152 = smul.addr %s151, 16
          %s153 = scalar_lea.vmem [#allocation6], %s152
          %s154 = smul.u32 2, %s19
          %s156 = ssub.s32 256, 256
          %157 = vsyncadd %s150, %s156
          %s158 = smul.addr %s154, 128
          %s159 = scalar_lea.hbm %s1, %s158
          %s160 = sshll.u32 %s153, 4
          %s161 = int_to_ptr.vmem [resolvable:$true] %s160
          %166 = dma.hbm_to_vmem [thread:$0]  %s159, 256, %s161, %s150, 128, 128, 8
        $region24: #{tpu_custom_call.1} parent=19 // pred_fallthru
          _
        // Predicated region
        $region25: #{tpu_custom_call.1} parent=19 // pred_check
          %p167 = pneg %p86
        $region26: #{tpu_custom_call.1} parent=19 // pred_check_branch
          %169 = sbr.rel (%p167) target = $region28
        $region27: #{tpu_custom_call.1} parent=19 // pred_region
          %s170 = sand.u32 %s76, 1
          %s171 = scalar_lea.sflag [#allocation8], %s170
          %s172 = sand.u32 %s76, 1
          %s173 = smul.addr %s172, 16
          %s174 = scalar_lea.vmem [#allocation7], %s173
          %s175 = smul.u32 2, %s19
          %s177 = ssub.s32 256, 256
          %178 = vsyncadd %s171, %s177
          %s179 = smul.addr %s175, 128
          %s180 = scalar_lea.hbm %s2, %s179
          %s181 = sshll.u32 %s174, 4
          %s182 = int_to_ptr.vmem [resolvable:$true] %s181
          %187 = dma.hbm_to_vmem [thread:$0]  %s180, 256, %s182, %s171, 128, 128, 8
        $region28: #{tpu_custom_call.1} parent=19 // pred_fallthru
          _
      $region20: #{tpu_custom_call.1} parent=5 // pred_fallthru
        _
      %p188 = scmp.le.s32.totalorder 1, %s19
      %p189 = scmp.lt.s32.totalorder %s19, 3
      %p190 = pnand %p188, %p189
      %p191 = pneg %p190
      // Predicated region
      $region29: #{tpu_custom_call.1} parent=5 // pred_check
        _
      $region30: #{tpu_custom_call.1} parent=5 // pred_check_branch
        %193 = sbr.rel (%p190) target = $region32
      $region31: #{tpu_custom_call.1} parent=5 // pred_region
        %s194 = ssub.s32 %s19, 1
        // Predicated region
        $region33: #{tpu_custom_call.1} parent=31 // pred_check
          %p195 = pneg %p40
        $region34: #{tpu_custom_call.1} parent=31 // pred_check_branch
          %197 = sbr.rel (%p195) target = $region36
        $region35: #{tpu_custom_call.1} parent=31 // pred_region
          %198 = dma.done [#allocation5], 16
        $region36: #{tpu_custom_call.1} parent=31 // pred_fallthru
          _
        %s199 = sand.u32 %s53, 1
        %s200 = scalar_lea.sflag [#allocation3], %s199
        %s201 = sand.u32 %s53, 1
        %s202 = smul.addr %s201, 16
        %s203 = scalar_lea.vmem [#allocation6], %s202
        // Predicated region
        $region37: #{tpu_custom_call.1} parent=31 // pred_check
          %p204 = pneg %p66
        $region38: #{tpu_custom_call.1} parent=31 // pred_check_branch
          %206 = sbr.rel (%p204) target = $region40
        $region39: #{tpu_custom_call.1} parent=31 // pred_region
          %207 = dma.done %s200, 256
        $region40: #{tpu_custom_call.1} parent=31 // pred_fallthru
          _
        %s208 = sand.u32 %s79, 1
        %s209 = scalar_lea.sflag [#allocation8], %s208
        %s210 = sand.u32 %s79, 1
        %s211 = smul.addr %s210, 16
        %s212 = scalar_lea.vmem [#allocation7], %s211
        // Predicated region
        $region41: #{tpu_custom_call.1} parent=31 // pred_check
          %p213 = pneg %p92
        $region42: #{tpu_custom_call.1} parent=31 // pred_check_branch
          %215 = sbr.rel (%p213) target = $region44
        $region43: #{tpu_custom_call.1} parent=31 // pred_region
          %216 = dma.done %s209, 256
        $region44: #{tpu_custom_call.1} parent=31 // pred_fallthru
          _
        %217 = sfence
        %p218 = pneg %p40
        %p219 = pneg %p37
        %s220 = sand.u32 %s53, 1
        %s221 = scalar_lea.sflag [#allocation3], %s220
        %s222 = sand.u32 %s53, 1
        %s223 = smul.addr %s222, 16
        %s224 = scalar_lea.vmem [#allocation6], %s223
        %p225 = pneg %p66
        %p226 = pneg %p63
        %s227 = sand.u32 %s79, 1
        %s228 = scalar_lea.sflag [#allocation8], %s227
        %s229 = sand.u32 %s79, 1
        %s230 = smul.addr %s229, 16
        %s231 = scalar_lea.vmem [#allocation7], %s230
        %p232 = pneg %p92
        %p233 = pneg %p89
        %p234 = pneg %p118
        %p235 = pneg %p115
        %s236 = sand.u32 %s105, 1
        %s237 = scalar_lea.sflag [#allocation4], %s236
        %s238 = sand.u32 %s105, 1
        %s239 = smul.addr %s238, 16
        %s240 = scalar_lea.vmem [#allocation9], %s239
        %s241 = smul.u32 2, %s24
        %s242 = smul.u32 2, %s24
        %s243 = smul.u32 2, %s24
        %v244 = vlaneseq
        %v245 = vand.u32 %v244, 127
        %v246 = vand.u32 %v245, 1
        %s247 = sld [smem:[#allocation2 + $0x10]]
        %v248 = vstv %s247
        %vm249 = vcmp.eq.s32.totalorder %v246, 1
        %s250 = sld [smem:[#allocation2 + $0x11]]
        %v251 = vstv %s250
        %v252 = vsel %vm249, %v251, %v248
        %s253 = sld [smem:[#allocation2 + $0xc]]
        %v254 = vstv %s253
        %s255 = sld [smem:[#allocation2 + $0xf]]
        %v256 = vstv %s255
        %v257 = vsel %vm249, %v256, %v254
        %s258 = sld [smem:[#allocation2 + $0xd]]
        %v259 = vstv %s258
        %s260 = sld [smem:[#allocation2 + $0xe]]
        %v261 = vstv %s260
        %v262 = vsel %vm249, %v261, %v259
        %s263 = sld [smem:[#allocation2]]
        %v264 = vstv %s263
        %s265 = sld [smem:[#allocation2 + $0x1]]
        %v266 = vstv %s265
        %v267 = vsel %vm249, %v266, %v264
        %s268 = sld [smem:[#allocation2 + $0x2]]
        %v269 = vstv %s268
        %s270 = sld [smem:[#allocation2 + $0x3]]
        %v271 = vstv %s270
        %v272 = vsel %vm249, %v271, %v269
        %s273 = sld [smem:[#allocation2 + $0x4]]
        %v274 = vstv %s273
        %s275 = sld [smem:[#allocation2 + $0x5]]
        %v276 = vstv %s275
        %v277 = vsel %vm249, %v276, %v274
        %s278 = sld [smem:[#allocation2 + $0x8]]
        %s279 = sld [smem:[#allocation2 + $0x9]]
        %s280 = sld [smem:[#allocation2 + $0xa]]
        %s281 = sld [smem:[#allocation2 + $0xb]]
        %s282 = sld [smem:[#allocation2 + $0x12]]
        %vm283 = vcmp.lt.s32.totalorder %v246, 1
        %v284 = vand.u32 %v245, 3
        %vm285 = vcmp.ge.s32.totalorder %v284, 1
        %vm286 = vcmp.lt.s32.totalorder %v284, 2
        %vm287 = vmand %vm285, %vm286
        %v288 = vand.u32 %v245, 7
        %vm289 = vcmp.ge.s32.totalorder %v288, 2
        %vm290 = vcmp.lt.s32.totalorder %v288, 4
        %vm291 = vmand %vm289, %vm290
        %v292 = vand.u32 %v245, 15
        %vm293 = vcmp.ge.s32.totalorder %v292, 4
        %vm294 = vcmp.lt.s32.totalorder %v292, 8
        %vm295 = vmand %vm293, %vm294
        %v296 = vand.u32 %v245, 31
        %vm297 = vcmp.ge.s32.totalorder %v296, 8
        %vm298 = vcmp.lt.s32.totalorder %v296, 16
        %vm299 = vmand %vm297, %vm298
        %v300 = vand.u32 %v245, 63
        %vm301 = vcmp.ge.s32.totalorder %v300, 16
        %vm302 = vcmp.lt.s32.totalorder %v300, 32
        %vm303 = vmand %vm301, %vm302
        %v304 = vand.u32 %v245, 127
        %vm305 = vcmp.ge.s32.totalorder %v304, 32
        %vm306 = vcmp.lt.s32.totalorder %v304, 64
        %vm307 = vmand %vm305, %vm306
        %v308 = vld [vmem:[%s203] sm:$0xff]
        %v309 = vld [vmem:[%s212] sm:$0xff]
        %v310 = vmul.f32 %v257, %v309
        %311 = vrot.lane.b32.xlu0 %v309, 127
        %v312 = vpop.permute.xlu0 %311
        %313 = vrot.lane.b32.xlu0 %v309, 1
        %v314 = vpop.permute.xlu0 %313
        %v315 = vsel %vm283, %v312, %v314
        %v316 = vmul.f32 %v262, %v315
        %v317 = vadd.f32 %v310, %v316
        %v318 = vsub.f32 %v308, %v317
        %v319 = vmul.f32 %v318, %v252
        %v320 = vmul.f32 %v319, %v319
        %321 = vrot.lane.b32.xlu0 %v320, 127
        %v322 = vpop.permute.xlu0 %321
        %323 = vrot.lane.b32.xlu0 %v320, 1
        %v324 = vpop.permute.xlu0 %323
        %v325 = vsel %vm283, %v322, %v324
        %v326 = vadd.f32 %v320, %v325
        %v327 = vstv %s282
        %v328 = vsub.f32 %v327, %v326
        %v329 = vmul.f32 %v267, %v308
        %330 = vrot.lane.b32.xlu0 %v329, 127
        %v331 = vpop.permute.xlu0 %330
        %332 = vrot.lane.b32.xlu0 %v329, 1
        %v333 = vpop.permute.xlu0 %332
        %v334 = vsel %vm283, %v331, %v333
        %v335 = vadd.f32 %v329, %v334
        %v336 = vstv %s278
        %v337 = vadd.f32 %v335, %v336
        %v338 = vtanh.pop %v337
        %v339 = vmul.f32 %v277, %v338
        %v340 = vadd.f32 %v308, %v339
        %v341 = vmul.f32 %v338, %v338
        %v342 = vsub.f32 1.0, %v341
        %v343 = vstv %s280
        %v344 = vmul.f32 %v342, %v343
        %v345 = vadd.f32 %v344, 1.0
        %v346 = vand.u32 2147483647, %v345
        %v347 = vadd.f32 %v346, 0.0001
        %v348 = vmul.f32 %v272, %v340
        %349 = vrot.lane.b32.xlu0 %v348, 127
        %v350 = vpop.permute.xlu0 %349
        %351 = vrot.lane.b32.xlu0 %v348, 1
        %v352 = vpop.permute.xlu0 %351
        %v353 = vsel %vm283, %v350, %v352
        %v354 = vadd.f32 %v348, %v353
        %v355 = vstv %s279
        %v356 = vadd.f32 %v354, %v355
        %v357 = vtanh.pop %v356
        %v358 = vmul.f32 %v357, %v357
        %v359 = vsub.f32 1.0, %v358
        %v360 = vstv %s281
        %v361 = vmul.f32 %v359, %v360
        %v362 = vadd.f32 %v361, 1.0
        %v363 = vand.u32 2147483647, %v362
        %v364 = vadd.f32 %v363, 0.0001
        %v365 = vmul.f32 %v347, %v364
        %v366 = vlog2.pop %v365
        %v367 = vmul.f32 %v366, 0.6931472
        %v368 = vadd.f32 %v328, %v367
        %369 = vrot.lane.b32.xlu0 %v368, 127
        %v370 = vpop.permute.xlu0 %369
        %v371 = vsel %vm287, %v370, %v368
        %372 = vrot.lane.b32.xlu0 %v371, 126
        %v373 = vpop.permute.xlu0 %372
        %v374 = vsel %vm291, %v373, %v371
        %375 = vrot.lane.b32.xlu0 %v374, 124
        %v376 = vpop.permute.xlu0 %375
        %v377 = vsel %vm295, %v376, %v374
        %378 = vrot.lane.b32.xlu0 %v377, 120
        %v379 = vpop.permute.xlu0 %378
        %v380 = vsel %vm299, %v379, %v377
        %381 = vrot.lane.b32.xlu0 %v380, 112
        %v382 = vpop.permute.xlu0 %381
        %v383 = vsel %vm303, %v382, %v380
        %384 = vrot.lane.b32.xlu0 %v383, 96
        %v385 = vpop.permute.xlu0 %384
        %v386 = vsel %vm307, %v385, %v383
        %vm387 = vcmask 523264
        %388 = vst.msk [vmem:[%s240] sm:$0xff] %vm387, %v386
        %s389 = scalar_lea.vmem %s203, 8 [#allocation6]
        %v390 = vld [vmem:[%s389] sm:$0xff]
        %s391 = scalar_lea.vmem %s212, 8 [#allocation7]
        %v392 = vld [vmem:[%s391] sm:$0xff]
        %v393 = vmul.f32 %v257, %v392
        %394 = vrot.lane.b32.xlu0 %v392, 127
        %v395 = vpop.permute.xlu0 %394
        %396 = vrot.lane.b32.xlu0 %v392, 1
        %v397 = vpop.permute.xlu0 %396
        %v398 = vsel %vm283, %v395, %v397
        %v399 = vmul.f32 %v262, %v398
        %v400 = vadd.f32 %v393, %v399
        %v401 = vsub.f32 %v390, %v400
        %v402 = vmul.f32 %v401, %v252
        %v403 = vmul.f32 %v402, %v402
        %404 = vrot.lane.b32.xlu0 %v403, 127
        %v405 = vpop.permute.xlu0 %404
        %406 = vrot.lane.b32.xlu0 %v403, 1
        %v407 = vpop.permute.xlu0 %406
        %v408 = vsel %vm283, %v405, %v407
        %v409 = vadd.f32 %v403, %v408
        %v410 = vsub.f32 %v327, %v409
        %v411 = vmul.f32 %v267, %v390
        %412 = vrot.lane.b32.xlu0 %v411, 127
        %v413 = vpop.permute.xlu0 %412
        %414 = vrot.lane.b32.xlu0 %v411, 1
        %v415 = vpop.permute.xlu0 %414
        %v416 = vsel %vm283, %v413, %v415
        %v417 = vadd.f32 %v411, %v416
        %v418 = vadd.f32 %v417, %v336
        %v419 = vtanh.pop %v418
        %v420 = vmul.f32 %v277, %v419
        %v421 = vadd.f32 %v390, %v420
        %v422 = vmul.f32 %v419, %v419
        %v423 = vsub.f32 1.0, %v422
        %v424 = vmul.f32 %v423, %v343
        %v425 = vadd.f32 %v424, 1.0
        %v426 = vand.u32 2147483647, %v425
        %v427 = vadd.f32 %v426, 0.0001
        %v428 = vmul.f32 %v272, %v421
        %429 = vrot.lane.b32.xlu0 %v428, 127
        %v430 = vpop.permute.xlu0 %429
        %431 = vrot.lane.b32.xlu0 %v428, 1
        %v432 = vpop.permute.xlu0 %431
        %v433 = vsel %vm283, %v430, %v432
        %v434 = vadd.f32 %v428, %v433
        %v435 = vadd.f32 %v434, %v355
        %v436 = vtanh.pop %v435
        %v437 = vmul.f32 %v436, %v436
        %v438 = vsub.f32 1.0, %v437
        %v439 = vmul.f32 %v438, %v360
        %v440 = vadd.f32 %v439, 1.0
        %v441 = vand.u32 2147483647, %v440
        %v442 = vadd.f32 %v441, 0.0001
        %v443 = vmul.f32 %v427, %v442
        %v444 = vlog2.pop %v443
        %v445 = vmul.f32 %v444, 0.6931472
        %v446 = vadd.f32 %v410, %v445
        %447 = vrot.lane.b32.xlu0 %v446, 127
        %v448 = vpop.permute.xlu0 %447
        %v449 = vsel %vm287, %v448, %v446
        %450 = vrot.lane.b32.xlu0 %v449, 126
        %v451 = vpop.permute.xlu0 %450
        %v452 = vsel %vm291, %v451, %v449
        %453 = vrot.lane.b32.xlu0 %v452, 124
        %v454 = vpop.permute.xlu0 %453
        %v455 = vsel %vm295, %v454, %v452
        %456 = vrot.lane.b32.xlu0 %v455, 120
        %v457 = vpop.permute.xlu0 %456
        %v458 = vsel %vm299, %v457, %v455
        %459 = vrot.lane.b32.xlu0 %v458, 112
        %v460 = vpop.permute.xlu0 %459
        %v461 = vsel %vm303, %v460, %v458
        %462 = vrot.lane.b32.xlu0 %v461, 96
        %v463 = vpop.permute.xlu0 %462
        %v464 = vsel %vm307, %v463, %v461
        %s465 = scalar_lea.vmem %s240, 8 [#allocation9]
        %466 = vst.msk [vmem:[%s465] sm:$0xff] %vm387, %v464
        %s467 = sand.u32 %s105, 1
        %s468 = scalar_lea.sflag [#allocation4], %s467
        %s469 = sand.u32 %s105, 1
        %s470 = smul.addr %s469, 16
        %s471 = scalar_lea.vmem [#allocation9], %s470
        // Predicated region
        $region45: #{tpu_custom_call.1} parent=31 // pred_check
          %p472 = pneg %p115
        $region46: #{tpu_custom_call.1} parent=31 // pred_check_branch
          %474 = sbr.rel (%p472) target = $region48
        $region47: #{tpu_custom_call.1} parent=31 // pred_region
          %s475 = smul.u32 2, %s24
          %s477 = ssub.s32 256, 256
          %478 = vsyncadd %s468, %s477
          %s479 = smul.addr %s475, 128
          %s480 = scalar_lea.hbm %s3, %s479
          %s481 = sshll.u32 %s471, 4
          %s482 = int_to_ptr.vmem [resolvable:$true] %s481
          %487 = dma.vmem_to_hbm [thread:$0]  %s482, 256, %s480, %s468, 128, 128, 8
        $region48: #{tpu_custom_call.1} parent=31 // pred_fallthru
          _
      $region32: #{tpu_custom_call.1} parent=5 // pred_fallthru
        _
      %p488 = scmp.le.s32.totalorder 2, %s19
      // Predicated region
      $region49: #{tpu_custom_call.1} parent=5 // pred_check
        %p489 = pneg %p488
      $region50: #{tpu_custom_call.1} parent=5 // pred_check_branch
        %491 = sbr.rel (%p489) target = $region52
      $region51: #{tpu_custom_call.1} parent=5 // pred_region
        %s492 = ssub.s32 %s19, 2
        // Predicated region
        $region53: #{tpu_custom_call.1} parent=51 // pred_check
          %p493 = pneg %p121
        $region54: #{tpu_custom_call.1} parent=51 // pred_check_branch
          %495 = sbr.rel (%p493) target = $region56
        $region55: #{tpu_custom_call.1} parent=51 // pred_region
          %s496 = sand.u32 %s106, 1
          %s497 = scalar_lea.sflag [#allocation4], %s496
          %s498 = sand.u32 %s106, 1
          %s499 = smul.addr %s498, 16
          %s500 = scalar_lea.vmem [#allocation9], %s499
          %501 = dma.done %s497, 256
        $region56: #{tpu_custom_call.1} parent=51 // pred_fallthru
          _
      $region52: #{tpu_custom_call.1} parent=5 // pred_fallthru
        _
    $region6: #{tpu_custom_call.1} parent=1 // loop_footer
      %s23 = sadd.s32 1, %s19
    $region7: #{tpu_custom_call.1} parent=1 // loop_footer_branch
      %18 = sbr.rel target = $region3
    $region8: #{tpu_custom_call.1} parent=1 // loop_exit
      _
    %502 = vsyncpa [#allocation3], 1
    %s503 = scalar_lea.sflag [#allocation3], 1
    %504 = vsyncpa %s503, 1
    %505 = vsyncpa [#allocation8], 1
    %s506 = scalar_lea.sflag [#allocation8], 1
    %507 = vsyncpa %s506, 1
    %508 = vsyncpa [#allocation4], 1
    %s509 = scalar_lea.sflag [#allocation4], 1
    %510 = vsyncpa %s509, 1
    %511 = vsyncpa [#allocation5], 1
    %s512 = scalar_lea.sflag [#allocation5], 1
    %513 = vsyncpa %s512, 1

</llo_original>
